<compile_context>
chip_gen: v7x
topology: tpu7x:2x2x1
jax: 0.10.0
libtpu: 0.0.40
codegen_flags: <defaults>
</compile_context>

<pallas_src>
import functools

import jax
import jax.numpy as jnp
from jax.experimental import pallas as pl
from jax.experimental.pallas import tpu as pltpu


def _cdiv(a, b):
    return -(-a // b)


def _round_up(a, b):
    return _cdiv(a, b) * b


_PER_BUFFER_BYTES = 8 * 1024 * 1024   # target VMEM per feature buffer (x2 double-buffered)
_MAX_FULL_K = 4096                    # above this, tile the contraction axis


def _film_kernel(x_ref, w_ref, o_ref, acc_ref, *, if_clip):
    """(tm, tk) feature tile x (1, tk) gate slice -> accumulate (tm, 1) gate."""
    k = pl.program_id(1)

    @pl.when(k == 0)
    def _init():
        acc_ref[...] = jnp.zeros_like(acc_ref)

    # VPU broadcast-multiply + XLU lane reduction; accumulate in f32.
    x = x_ref[...].astype(jnp.float32)        # (tm, tk)
    w = w_ref[...].astype(jnp.float32)        # (1, tk), broadcasts over rows
    acc_ref[...] += jnp.sum(x * w, axis=-1, keepdims=True)

    @pl.when(k == pl.num_programs(1) - 1)
    def _finalize():
        out = acc_ref[...]
        if if_clip:                            # torch.clamp(out_act(.), 0, 1)
            out = jnp.clip(out, 0.0, 1.0)
        # out_act is Identity by default -> nothing else to apply.
        o_ref[...] = out.astype(o_ref.dtype)
        # TODO(synk): if the gate is immediately used to scale `features`
        # downstream (typical FiLM usage), fuse that multiply here to avoid
        # re-reading N*K from HBM in a second mem-bound pass.


def film_forward(features, weight, *, if_clip=False, row_tile=None,
                 vmem_budget_per_buffer=_PER_BUFFER_BYTES):
    """Pallas TPU forward of Film: features (..., K) -> gate (..., 1).

    `weight` may be given as (1, K) (PyTorch nn.Linear layout), (K,), or (K, 1).
    """
    *lead, K = features.shape
    x2d = features.reshape(-1, K)              # free: contiguous row-major view
    N = x2d.shape[0]
    w = jnp.asarray(weight).reshape(1, K)

    dtype = x2d.dtype
    itemsize = jnp.dtype(dtype).itemsize
    pack = max(8, 32 // itemsize)              # sublane packing: f32 8, bf16 16, int8 32

    # ---- contraction (K) tiling: keep tm large even for huge in_feats -------
    if K <= _MAX_FULL_K:
        nk, tk = 1, K                           # full-K block (any K is legal)
    else:
        nk = _cdiv(K, _MAX_FULL_K)
        tk = _round_up(_cdiv(K, nk), 128)       # lane-aligned K chunks
        k_pad = nk * tk
        if k_pad != K:
            # Rare path (huge, non-128-splittable in_feats): zero-pad so padded
            # lanes contribute exactly 0 to the dot product.
            # TODO(synk): replace with in-kernel lane masking to avoid the copy.
            x2d = jnp.pad(x2d, ((0, 0), (0, k_pad - K)))
            w = jnp.pad(w, ((0, 0), (0, k_pad - K)))

    lanes = _round_up(tk, 128)                  # VMEM lane footprint of one row

    # ---- row (N) tiling: ~vmem_budget_per_buffer bytes per feature buffer ---
    if row_tile is None:
        tm = max(pack, vmem_budget_per_buffer // (lanes * itemsize))
    else:
        tm = max(pack, int(row_tile))
    tm = max(pack, (tm // pack) * pack)
    if tm >= N:
        tm = N                                  # single full-dim row block
    nb = _cdiv(N, tm)                           # partial last block is masked by Pallas

    # ---- VMEM budget / scheduler hint ---------------------------------------
    x_buf = tm * lanes * itemsize
    vmem_limit = int(min(56 * 2**20, max(32 * 2**20, 3 * x_buf)))
    cost = pl.CostEstimate(
        flops=2 * N * K,
        transcendentals=0,
        bytes_accessed=N * K * itemsize + K * w.dtype.itemsize + N * itemsize,
    )

    out = pl.pallas_call(
        functools.partial(_film_kernel, if_clip=if_clip),
        out_shape=jax.ShapeDtypeStruct((N, 1), dtype),
        grid_spec=pltpu.PrefetchScalarGridSpec(
            num_scalar_prefetch=0,
            grid=(nb, nk),                      # reduction axis last
            in_specs=[
                pl.BlockSpec((tm, tk), lambda i, k: (i, k)),   # feature row tile
                pl.BlockSpec((1, tk), lambda i, k: (0, k)),    # gate weight slice
            ],
            out_specs=pl.BlockSpec((tm, 1), lambda i, k: (i, 0)),
            scratch_shapes=[pltpu.VMEM((tm, 1), jnp.float32)],
        ),
        compiler_params=pltpu.CompilerParams(
            dimension_semantics=("parallel", "arbitrary"),
            vmem_limit_bytes=vmem_limit,
        ),
        cost_estimate=cost,
    )(x2d, w)

    return out.reshape(*lead, 1)


if __name__ == "__main__":
    key = jax.random.PRNGKey(0)
    k1, k2, k3, k4, k5, k6 = jax.random.split(key, 6)

    def make_case(kx, kw, n, in_feats, dtype=jnp.float32):
        x = jax.random.normal(kx, (n, in_feats), dtype=jnp.float32)
        bound = 1.0 / (in_feats ** 0.5)        # torch.nn.Linear kaiming-uniform bound
        w = jax.random.uniform(kw, (1, in_feats), minval=-bound, maxval=bound,
                               dtype=jnp.float32)
        return x.astype(dtype), w.astype(dtype)

    # Case 1: module-scale small case (single full-dim block), f32.
    x1, w1 = make_case(k1, k2, 16, 32)
    out1 = jax.block_until_ready(film_forward(x1, w1))
    ref1 = x1 @ w1.T
    assert out1.shape == (16, 1)
    assert jnp.allclose(out1, ref1, atol=1e-4, rtol=1e-4)

    # Case 1b: if_clip=True branch of the module.
    out1c = jax.block_until_ready(film_forward(x1, w1, if_clip=True))
    assert jnp.allclose(out1c, jnp.clip(ref1, 0.0, 1.0), atol=1e-4, rtol=1e-4)

    # Case 2: multi-row-block pipeline (row_tile forced small so the test stays small).
    x2, w2 = make_case(k3, k4, 2048, 256)
    out2 = jax.block_until_ready(film_forward(x2, w2, row_tile=512))
    ref2 = x2 @ w2.T
    assert jnp.allclose(out2, ref2, atol=1e-4, rtol=1e-4)

    # Case 3: large in_feats -> K-tiled reduction with the f32 accumulator.
    x3, w3 = make_case(k5, k6, 128, 4608)
    out3 = jax.block_until_ready(film_forward(x3, w3))
    ref3 = x3 @ w3.T
    assert jnp.allclose(out3, ref3, atol=1e-3, rtol=1e-3)

    # Case 4: bf16 features (sublane packing of 16 handled by the tile chooser).
    x4, w4 = x2.astype(jnp.bfloat16), w2.astype(jnp.bfloat16)
    out4 = jax.block_until_ready(film_forward(x4, w4, row_tile=256))
    ref4 = x4.astype(jnp.float32) @ w4.astype(jnp.float32).T
    assert out4.dtype == jnp.bfloat16
    assert jnp.allclose(out4.astype(jnp.float32), ref4, atol=5e-2, rtol=5e-2)

    print("KERNEL_OK")
</pallas_src>

<mosaic_0001>
module attributes {stable_mosaic.version = 11 : i64} {
  func.func @_film_kernel(%arg0: i32, %arg1: i32, %arg2: memref<16x32xf32, #tpu.memory_space<vmem>>, %arg3: memref<1x32xf32, #tpu.memory_space<vmem>>, %arg4: memref<16x1xf32, #tpu.memory_space<vmem>>, %arg5: memref<16x1xf32, #tpu.memory_space<vmem>>) attributes {dimension_semantics = [#tpu.dimension_semantics<parallel>, #tpu.dimension_semantics<arbitrary>], iteration_bounds = array<i64: 1, 1>, scalar_prefetch = 0 : i64, scratch_operands = 1 : i64, tpu.core_type = #tpu.core_type<tc>, window_params = [{transform_indices = @transform_0, window_bounds = array<i64: 16, 32>}, {transform_indices = @transform_1, window_bounds = array<i64: 1, 32>}, {transform_indices = @transform_2, window_bounds = array<i64: 16, 1>}]} {
    %c0_i32 = arith.constant 0 : i32
    %0 = arith.cmpi eq, %arg1, %c0_i32 : i32
    %1 = arith.extui %0 : i1 to i32
    %c0_i32_0 = arith.constant 0 : i32
    %2 = arith.cmpi ne, %1, %c0_i32_0 : i32
    scf.if %2 {
      %cst_10 = arith.constant 0.000000e+00 : f32
      %15 = vector.broadcast %cst_10 : f32 to vector<16x1xf32>
      %c0_11 = arith.constant 0 : index
      %c0_12 = arith.constant 0 : index
      %16 = vector.load %arg5[%c0_11, %c0_12] : memref<16x1xf32, #tpu.memory_space<vmem>>, vector<16x1xf32>
      tpu.vector_store %arg5[%c0_11, %c0_12], %15 {strides = array<i32>} : memref<16x1xf32, #tpu.memory_space<vmem>>, vector<16x1xf32>,
    } else {
    }
    %c0 = arith.constant 0 : index
    %c0_1 = arith.constant 0 : index
    %3 = vector.load %arg2[%c0, %c0_1] : memref<16x32xf32, #tpu.memory_space<vmem>>, vector<16x32xf32>
    %c0_2 = arith.constant 0 : index
    %c0_3 = arith.constant 0 : index
    %4 = vector.load %arg3[%c0_2, %c0_3] : memref<1x32xf32, #tpu.memory_space<vmem>>, vector<1x32xf32>
    %c0_4 = arith.constant 0 : index
    %c0_5 = arith.constant 0 : index
    %5 = vector.load %arg5[%c0_4, %c0_5] : memref<16x1xf32, #tpu.memory_space<vmem>>, vector<16x1xf32>
    %6 = vector.broadcast %4 : vector<1x32xf32> to vector<16x32xf32>
    %7 = arith.mulf %3, %6 : vector<16x32xf32>
    %cst = arith.constant dense<0.000000e+00> : vector<16xf32>
    %8 = vector.multi_reduction <add>, %7, %cst [1] : vector<16x32xf32> to vector<16xf32>
    %9 = vector.shape_cast %8 : vector<16xf32> to vector<16x1xf32>
    %10 = arith.addf %5, %9 : vector<16x1xf32>
    %c0_6 = arith.constant 0 : index
    %c0_7 = arith.constant 0 : index
    %11 = vector.load %arg5[%c0_6, %c0_7] : memref<16x1xf32, #tpu.memory_space<vmem>>, vector<16x1xf32>
    tpu.vector_store %arg5[%c0_6, %c0_7], %10 {strides = array<i32>} : memref<16x1xf32, #tpu.memory_space<vmem>>, vector<16x1xf32>,
    %c0_i32_8 = arith.constant 0 : i32
    %12 = arith.cmpi eq, %arg1, %c0_i32_8 : i32
    %13 = arith.extui %12 : i1 to i32
    %c0_i32_9 = arith.constant 0 : i32
    %14 = arith.cmpi ne, %13, %c0_i32_9 : i32
    scf.if %14 {
      %c0_10 = arith.constant 0 : index
      %c0_11 = arith.constant 0 : index
      %15 = vector.load %arg5[%c0_10, %c0_11] : memref<16x1xf32, #tpu.memory_space<vmem>>, vector<16x1xf32>
      %c0_12 = arith.constant 0 : index
      %c0_13 = arith.constant 0 : index
      %16 = vector.load %arg4[%c0_12, %c0_13] : memref<16x1xf32, #tpu.memory_space<vmem>>, vector<16x1xf32>
      tpu.vector_store %arg4[%c0_12, %c0_13], %15 {strides = array<i32>} : memref<16x1xf32, #tpu.memory_space<vmem>>, vector<16x1xf32>,
    } else {
    }
    return
  }
  func.func @transform_0(%arg0: i32, %arg1: i32) -> (i32, i32) {
    %c0_i32 = arith.constant 0 : i32
    return %arg0, %arg1 : i32, i32
  }
  func.func @transform_1(%arg0: i32, %arg1: i32) -> (i32, i32) {
    %c0_i32 = arith.constant 0 : i32
    %c0_i32_0 = arith.constant 0 : i32
    return %c0_i32, %arg1 : i32, i32
  }
  func.func @transform_2(%arg0: i32, %arg1: i32) -> (i32, i32) {
    %c0_i32 = arith.constant 0 : i32
    %c0_i32_0 = arith.constant 0 : i32
    return %arg0, %c0_i32 : i32, i32
  }
}

</mosaic_0001>

<llo_original>
// kernel: tpu_custom_call.1
$region0: #{tpu_custom_call.1}
  #allocation0 [shape = 'u32[]', space=smem, size = 0x4, offset = 0x4, fixed_abs, tag = 'smem constant byte address 0x4 - core index']
  #allocation1 [shape = 'u32[144,128]{1,0:T(1,128)}', space=vmem, size = 0x12000, scoped, tag = 'internal scratch']
  #allocation2 [shape = 'f32[16,1]{1,0:T(8,128)}', space=vmem, size = 0x2000, scoped, tag = 'scratch operand']
  %s0 = inlined_call_operand.hbm [shape: f32[16,32], index: 0, kind: input, shape index: {}]
  %s1 = inlined_call_operand.vmem [shape: f32[1,32], index: 1, kind: input, shape index: {}]
  %s2 = inlined_call_operand.vmem [shape: f32[16,1], index: 2, kind: output, shape index: {}]
  %s3 = sld [smem:[#allocation0]]
  $region30: #{tpu_custom_call.1} parent=0
    _
  %s5 = ssub.s32 1, %s3
  %s6 = scalar_select 0, %s5, %s3
  $region1: #{tpu_custom_call.1} parent=0
    #allocation3 [shape = 'u8[8192]{0}', space=vmem, size = 0x2000, scoped, tag = 'input window, operand 0, single buffered']
    #allocation4 [shape = 's32[1]{0}', space=sflag, size = 0x4, scoped, tag = 'scoped memory for tpu_custom_call.1']
    %7 = vsyncpa [#allocation4], 0
    // Predicated region
    $region2: #{tpu_custom_call.1} parent=1 // pred_check
      _
    $region3: #{tpu_custom_call.1} parent=1 // pred_check_branch
      %9 = sbr.rel (0) target = $region5
    $region4: #{tpu_custom_call.1} parent=1 // pred_region
      %s11 = ssub.s32 256, 256
      %12 = vsyncadd [#allocation4], %s11
      %s13 = sshll.u32 [#allocation3], 4
      %s14 = int_to_ptr.vmem [resolvable:$true] %s13
      %19 = dma.hbm_to_vmem [thread:$0]  %s0, 256, %s14, [#allocation4], 128, 128, 8
    $region5: #{tpu_custom_call.1} parent=1 // pred_fallthru
      _
    // Predicated region
    $region6: #{tpu_custom_call.1} parent=1 // pred_check
      _
    $region7: #{tpu_custom_call.1} parent=1 // pred_check_branch
      %21 = sbr.rel (0) target = $region9
    $region8: #{tpu_custom_call.1} parent=1 // pred_region
      _
    $region9: #{tpu_custom_call.1} parent=1 // pred_fallthru
      _
    // Predicated region
    $region10: #{tpu_custom_call.1} parent=1 // pred_check
      _
    $region11: #{tpu_custom_call.1} parent=1 // pred_check_branch
      %23 = sbr.rel (0) target = $region13
    $region12: #{tpu_custom_call.1} parent=1 // pred_region
      %24 = dma.done [#allocation4], 256
    $region13: #{tpu_custom_call.1} parent=1 // pred_fallthru
      _
    %p25 = scmp.eq.s32.totalorder 0, 0
    // Predicated region
    $region14: #{tpu_custom_call.1} parent=1 // pred_check
      %p26 = pneg %p25
    $region15: #{tpu_custom_call.1} parent=1 // pred_check_branch
      %28 = sbr.rel (%p26) target = $region17
    $region16: #{tpu_custom_call.1} parent=1 // pred_region
      %vm29 = vcmask 7168
      %30 = vst.msk [vmem:[#allocation2] sm:$0xff] %vm29, 0.0
      %31 = vst.msk [vmem:[#allocation2 + $0x8] sm:$0xff] %vm29, 0.0
    $region17: #{tpu_custom_call.1} parent=1 // pred_fallthru
      _
    %v32 = vld [vmem:[#allocation3] sm:$0xff]
    %v33 = vld [vmem:[#allocation3 + $0x8] sm:$0xff]
    %v34 = vld [vmem:[%s1] sm:$0x1]
    %v35 = vld [vmem:[#allocation2] sm:$0xff]
    %v36 = vld [vmem:[#allocation2 + $0x8] sm:$0xff]
    %v38 = vlaneseq
    %v39 = vshrl.u32 %v38, 7
    %v40 = vsub.s32 0, %v39
    %v41 = vrot.slane %v34, %v40
    %v43 = vmul.f32 %v32, %v41
    %v44 = vmul.f32 %v33, %v41
    %vm45 = vcmask 261120
    %v46 = vsel %vm45, %v43, 0.0
    %47 = vadd.xlane.f32.xlu0 %v46
    %v48 = vpop.xlane.xlu0 %47
    %v49 = vsel %vm45, %v44, 0.0
    %50 = vadd.xlane.f32.xlu0 %v49
    %v51 = vpop.xlane.xlu0 %50
    %v52 = vadd.f32 %v35, %v48
    %v53 = vadd.f32 %v36, %v51
    %vm54 = vcmask 7168
    %55 = vst.msk [vmem:[#allocation2] sm:$0xff] %vm54, %v52
    %56 = vst.msk [vmem:[#allocation2 + $0x8] sm:$0xff] %vm54, %v53
    // Predicated region
    $region18: #{tpu_custom_call.1} parent=1 // pred_check
      %p57 = pneg %p25
    $region19: #{tpu_custom_call.1} parent=1 // pred_check_branch
      %59 = sbr.rel (%p57) target = $region21
    $region20: #{tpu_custom_call.1} parent=1 // pred_region
      %v60 = vld [vmem:[#allocation2] sm:$0xff]
      %v61 = vld [vmem:[#allocation2 + $0x8] sm:$0xff]
      %62 = vst.msk [vmem:[%s2] sm:$0xff] %vm54, %v60
      %63 = vst.msk [vmem:[%s2 + $0x8] sm:$0xff] %vm54, %v61
    $region21: #{tpu_custom_call.1} parent=1 // pred_fallthru
      _
    // Predicated region
    $region22: #{tpu_custom_call.1} parent=1 // pred_check
      _
    $region23: #{tpu_custom_call.1} parent=1 // pred_check_branch
      %65 = sbr.rel (0) target = $region25
    $region24: #{tpu_custom_call.1} parent=1 // pred_region
      _
    $region25: #{tpu_custom_call.1} parent=1 // pred_fallthru
      _
    // Predicated region
    $region26: #{tpu_custom_call.1} parent=1 // pred_check
      _
    $region27: #{tpu_custom_call.1} parent=1 // pred_check_branch
      %67 = sbr.rel (0) target = $region29
    $region28: #{tpu_custom_call.1} parent=1 // pred_region
      _
    $region29: #{tpu_custom_call.1} parent=1 // pred_fallthru
      _
    %68 = vsyncpa [#allocation4], 1

</llo_original>
